<compile_context>
chip_gen: v5e
topology: v5e:2x2
jax: 0.10.0
libtpu: 0.0.40
codegen_flags: <defaults>
</compile_context>

<pallas_src>
import math
from functools import partial

import jax
import jax.numpy as jnp
from jax import lax
from jax.experimental import pallas as pl
from jax.experimental.pallas import tpu as pltpu


# ---------------------------------------------------------------------------
# Kernel 1: fused K / V projections, computed once per batch element.
# One lane-dense (S, D) @ (D, H*dk) matmul per projection (f32 accumulate),
# results stored as bf16 for the attention kernel.
# ---------------------------------------------------------------------------
def kv_projection_kernel(k_ref, v_ref, wk_ref, bk_ref, wv_ref, bv_ref,
                         kp_ref, vp_ref):
    kp_ref[0] = (jnp.dot(k_ref[0], wk_ref[...],
                         preferred_element_type=jnp.float32)
                 + bk_ref[...]).astype(kp_ref.dtype)
    vp_ref[0] = (jnp.dot(v_ref[0], wv_ref[...],
                         preferred_element_type=jnp.float32)
                 + bv_ref[...]).astype(vp_ref.dtype)


# ---------------------------------------------------------------------------
# Kernel 2: per-query-tile attention + fused output projection.
#   q_ref : (1, TL, D) bf16          kp_ref : (1, S, H*dk) bf16
#   vp_ref: (1, S, H*dv) bf16        wq_ref : (D, H*dk) bf16 (scale folded in)
#   bq_ref: (1, H*dk) f32 (scaled)   wo_ref : (H*dv, D) bf16   bo_ref: (1, D) f32
#   scratch: qp_ref (TL, H*dk) bf16, hbuf_ref (TL, H*dv) bf16
# ---------------------------------------------------------------------------
def attention_kernel(q_ref, kp_ref, vp_ref, wq_ref, bq_ref, wo_ref, bo_ref,
                     out_ref, qp_ref, hbuf_ref,
                     *, n_heads, d_keys, d_values):
    # Fused, lane-dense query projection; 1/sqrt(d_keys) pre-folded into wq/bq.
    qp_ref[...] = (jnp.dot(q_ref[0], wq_ref[...],
                           preferred_element_type=jnp.float32)
                   + bq_ref[...]).astype(jnp.bfloat16)

    # Static Python loop over heads (H small); all per-head operands are
    # static lane slices of VMEM refs, so vreg pressure stays bounded.
    # TODO(synk): online (flash-style) softmax over S-tiles for very long S.
    for h in range(n_heads):
        qh = qp_ref[:, h * d_keys:(h + 1) * d_keys]          # (TL, dk) bf16
        kh = kp_ref[0, :, h * d_keys:(h + 1) * d_keys]       # (S,  dk) bf16
        vh = vp_ref[0, :, h * d_values:(h + 1) * d_values]   # (S,  dv) bf16

        # scores = qh @ kh^T via last-dim contraction (no XLU transpose).
        scores = lax.dot_general(
            qh, kh, dimension_numbers=(((1,), (1,)), ((), ())),
            preferred_element_type=jnp.float32)               # (TL, S) f32

        m = jnp.max(scores, axis=-1, keepdims=True)
        p = jnp.exp(scores - m)
        denom = jnp.sum(p, axis=-1, keepdims=True)
        p = (p * pl.reciprocal(denom, approx=True)).astype(jnp.bfloat16)

        head_out = jnp.dot(p, vh, preferred_element_type=jnp.float32)  # (TL, dv)
        hbuf_ref[:, h * d_values:(h + 1) * d_values] = head_out.astype(jnp.bfloat16)

    # Single fused output projection: (TL, H*dv) @ (H*dv, D) + bias.
    out = jnp.dot(hbuf_ref[...], wo_ref[...],
                  preferred_element_type=jnp.float32) + bo_ref[...]
    out_ref[0] = out.astype(out_ref.dtype)


def attention_layer(queries_x, keys_x, values_x, params, n_heads, *, tile_l=128):
    """queries_x: (B, L, D); keys_x/values_x: (B, S, D). Returns (B, L, D).
    tile_l=256 is a good choice on v6e (128 MiB VMEM, 256-wide MXU)."""
    B, L, D = queries_x.shape
    _, S, _ = keys_x.shape
    wq, bq, wk, bk, wv, bv, wo, bo = params
    H = n_heads
    d_keys = wq.shape[1] // H
    d_values = wv.shape[1] // H
    HDk = H * d_keys
    HDv = H * d_values
    out_dtype = queries_x.dtype

    scale = 1.0 / math.sqrt(d_keys)

    # bf16 activations & matmul weights (f32 MXU accumulation in-kernel);
    # biases stay f32; softmax stays f32.  Scale folded into wq AND bq.
    q_bf = queries_x.astype(jnp.bfloat16)
    k_bf = keys_x.astype(jnp.bfloat16)
    v_bf = values_x.astype(jnp.bfloat16)
    wq_s = (wq * scale).astype(jnp.bfloat16)    # (D, H*dk)
    bq_s = bq * scale                            # (1, H*dk) f32
    wk_b = wk.astype(jnp.bfloat16)               # (D, H*dk)
    wv_b = wv.astype(jnp.bfloat16)               # (D, H*dv)
    wo_b = wo.astype(jnp.bfloat16)               # (H*dv, D)

    # ---- K/V projections: once per batch element (not per query tile) ----
    kp, vp = pl.pallas_call(
        kv_projection_kernel,
        out_shape=(jax.ShapeDtypeStruct((B, S, HDk), jnp.bfloat16),
                   jax.ShapeDtypeStruct((B, S, HDv), jnp.bfloat16)),
        grid_spec=pltpu.PrefetchScalarGridSpec(
            num_scalar_prefetch=0,
            grid=(B,),
            in_specs=[
                pl.BlockSpec((1, S, D), lambda b: (b, 0, 0)),    # keys_x
                pl.BlockSpec((1, S, D), lambda b: (b, 0, 0)),    # values_x
                pl.BlockSpec((D, HDk), lambda b: (0, 0)),        # wk
                pl.BlockSpec((1, HDk), lambda b: (0, 0)),        # bk
                pl.BlockSpec((D, HDv), lambda b: (0, 0)),        # wv
                pl.BlockSpec((1, HDv), lambda b: (0, 0)),        # bv
            ],
            out_specs=[
                pl.BlockSpec((1, S, HDk), lambda b: (b, 0, 0)),
                pl.BlockSpec((1, S, HDv), lambda b: (b, 0, 0)),
            ],
        ),
        compiler_params=pltpu.CompilerParams(
            dimension_semantics=("parallel",)),
    )(k_bf, v_bf, wk_b, bk, wv_b, bv)

    # ---- Query-tile size & host-side padding of L (keeps TL-sized tiles
    # for Informer lengths like 96 / 336 / 720) ----
    if L >= tile_l:
        TL = tile_l
    else:
        TL = ((L + 7) // 8) * 8
    Lp = ((L + TL - 1) // TL) * TL
    if Lp != L:
        q_bf = jnp.pad(q_bf, ((0, 0), (0, Lp - L), (0, 0)))

    kernel = partial(attention_kernel,
                     n_heads=H, d_keys=d_keys, d_values=d_values)

    out = pl.pallas_call(
        kernel,
        out_shape=jax.ShapeDtypeStruct((B, Lp, D), out_dtype),
        grid_spec=pltpu.PrefetchScalarGridSpec(
            num_scalar_prefetch=0,
            grid=(B, Lp // TL),
            in_specs=[
                pl.BlockSpec((1, TL, D), lambda b, l: (b, l, 0)),    # queries
                pl.BlockSpec((1, S, HDk), lambda b, l: (b, 0, 0)),   # projected K
                pl.BlockSpec((1, S, HDv), lambda b, l: (b, 0, 0)),   # projected V
                pl.BlockSpec((D, HDk), lambda b, l: (0, 0)),         # wq (scaled)
                pl.BlockSpec((1, HDk), lambda b, l: (0, 0)),         # bq (scaled)
                pl.BlockSpec((HDv, D), lambda b, l: (0, 0)),         # wo
                pl.BlockSpec((1, D), lambda b, l: (0, 0)),           # bo
            ],
            out_specs=pl.BlockSpec((1, TL, D), lambda b, l: (b, l, 0)),
            scratch_shapes=[
                pltpu.VMEM((TL, HDk), jnp.bfloat16),   # projected-Q scratch
                pltpu.VMEM((TL, HDv), jnp.bfloat16),   # head-output scratch
            ],
        ),
        compiler_params=pltpu.CompilerParams(
            dimension_semantics=("parallel", "parallel")),
    )(q_bf, kp, vp, wq_s, bq_s, wo_b, bo)

    return out[:, :L, :] if Lp != L else out


def init_params(key, d_model, n_heads, d_keys=None, d_values=None):
    """Deterministic init mimicking nn.Linear (uniform +-1/sqrt(fan_in)).
    Weights are stored as (in_features, out_features) so the math is x @ W."""
    d_keys = d_keys or d_model // n_heads
    d_values = d_values or d_model // n_heads
    keys = jax.random.split(key, 8)

    def linear(kw, kb, fan_in, fan_out):
        bound = 1.0 / math.sqrt(fan_in)
        w = jax.random.uniform(kw, (fan_in, fan_out), jnp.float32, -bound, bound)
        b = jax.random.uniform(kb, (1, fan_out), jnp.float32, -bound, bound)
        return w, b

    wq, bq = linear(keys[0], keys[1], d_model, d_keys * n_heads)
    wk, bk = linear(keys[2], keys[3], d_model, d_keys * n_heads)
    wv, bv = linear(keys[4], keys[5], d_model, d_values * n_heads)
    wo, bo = linear(keys[6], keys[7], d_values * n_heads, d_model)
    return (wq, bq, wk, bk, wv, bv, wo, bo)


def reference(queries_x, keys_x, values_x, params, n_heads):
    wq, bq, wk, bk, wv, bv, wo, bo = params
    B, L, D = queries_x.shape
    _, S, _ = keys_x.shape
    dk = wq.shape[1] // n_heads
    dv = wv.shape[1] // n_heads
    Q = (queries_x @ wq + bq).reshape(B, L, n_heads, dk)
    K = (keys_x @ wk + bk).reshape(B, S, n_heads, dk)
    V = (values_x @ wv + bv).reshape(B, S, n_heads, dv)
    scores = jnp.einsum("blhe,bshe->bhls", Q, K) / math.sqrt(dk)
    p = jax.nn.softmax(scores, axis=-1)
    out = jnp.einsum("bhls,bshd->blhd", p, V).reshape(B, L, n_heads * dv)
    return out @ wo + bo


if __name__ == "__main__":
    B, L, S, d_model, n_heads = 2, 8, 8, 32, 4

    key = jax.random.PRNGKey(0)
    kq, kk, kv, kp = jax.random.split(key, 4)
    queries_x = jax.random.normal(kq, (B, L, d_model), jnp.float32)
    keys_x = jax.random.normal(kk, (B, S, d_model), jnp.float32)
    values_x = jax.random.normal(kv, (B, S, d_model), jnp.float32)

    params = init_params(kp, d_model, n_heads)

    out = attention_layer(queries_x, keys_x, values_x, params, n_heads)
    out = jax.block_until_ready(out)

    ref = reference(queries_x, keys_x, values_x, params, n_heads)
    assert out.shape == (B, L, d_model)
    # bf16 activations / matmul operands -> relaxed tolerance vs f32 reference.
    assert jnp.allclose(out, ref, atol=2e-2, rtol=2e-2), "mismatch vs reference"

    print("KERNEL_OK")
</pallas_src>

<mosaic_0001>
module attributes {stable_mosaic.version = 11 : i64} {
  func.func @kv_projection_kernel(%arg0: i32, %arg1: memref<1x8x32xbf16, #tpu.memory_space<vmem>>, %arg2: memref<1x8x32xbf16, #tpu.memory_space<vmem>>, %arg3: memref<32x32xbf16, #tpu.memory_space<vmem>>, %arg4: memref<1x32xf32, #tpu.memory_space<vmem>>, %arg5: memref<32x32xbf16, #tpu.memory_space<vmem>>, %arg6: memref<1x32xf32, #tpu.memory_space<vmem>>, %arg7: memref<1x8x32xbf16, #tpu.memory_space<vmem>>, %arg8: memref<1x8x32xbf16, #tpu.memory_space<vmem>>) attributes {dimension_semantics = [#tpu.dimension_semantics<parallel>], iteration_bounds = array<i64: 2>, scalar_prefetch = 0 : i64, scratch_operands = 0 : i64, tpu.core_type = #tpu.core_type<tc>, window_params = [{transform_indices = @transform_0, window_bounds = array<i64: 1, 8, 32>}, {transform_indices = @transform_1, window_bounds = array<i64: 1, 8, 32>}, {pipeline_mode = #tpu.pipeline_mode<synchronous>, transform_indices = @transform_2, window_bounds = array<i64: 32, 32>}, {pipeline_mode = #tpu.pipeline_mode<synchronous>, transform_indices = @transform_3, window_bounds = array<i64: 1, 32>}, {pipeline_mode = #tpu.pipeline_mode<synchronous>, transform_indices = @transform_4, window_bounds = array<i64: 32, 32>}, {pipeline_mode = #tpu.pipeline_mode<synchronous>, transform_indices = @transform_5, window_bounds = array<i64: 1, 32>}, {transform_indices = @transform_6, window_bounds = array<i64: 1, 8, 32>}, {transform_indices = @transform_7, window_bounds = array<i64: 1, 8, 32>}]} {
    %c0 = arith.constant 0 : index
    %c0_0 = arith.constant 0 : index
    %c0_1 = arith.constant 0 : index
    %0 = vector.load %arg1[%c0, %c0_0, %c0_1] : memref<1x8x32xbf16, #tpu.memory_space<vmem>>, vector<1x8x32xbf16>
    %1 = vector.shape_cast %0 : vector<1x8x32xbf16> to vector<8x32xbf16>
    %c0_2 = arith.constant 0 : index
    %c0_3 = arith.constant 0 : index
    %2 = vector.load %arg3[%c0_2, %c0_3] : memref<32x32xbf16, #tpu.memory_space<vmem>>, vector<32x32xbf16>
    %cst = arith.constant dense<0.000000e+00> : vector<8x32xf32>
    %3 = tpu.matmul %1, %2, %cst {dimension_numbers = #tpu.dot_dimension_numbers<[1], [0], [0], [1], [0, 0, 1, 1], [], []>} : vector<8x32xbf16>, vector<32x32xbf16>, vector<8x32xf32> -> vector<8x32xf32>
    %c0_4 = arith.constant 0 : index
    %c0_5 = arith.constant 0 : index
    %4 = vector.load %arg4[%c0_4, %c0_5] : memref<1x32xf32, #tpu.memory_space<vmem>>, vector<1x32xf32>
    %5 = vector.broadcast %4 : vector<1x32xf32> to vector<8x32xf32>
    %6 = arith.addf %3, %5 : vector<8x32xf32>
    %7 = arith.truncf %6 : vector<8x32xf32> to vector<8x32xbf16>
    %c0_6 = arith.constant 0 : index
    %c0_7 = arith.constant 0 : index
    %c0_8 = arith.constant 0 : index
    %8 = vector.load %arg7[%c0_6, %c0_7, %c0_8] : memref<1x8x32xbf16, #tpu.memory_space<vmem>>, vector<1x8x32xbf16>
    %9 = vector.shape_cast %8 : vector<1x8x32xbf16> to vector<8x32xbf16>
    %10 = vector.shape_cast %7 : vector<8x32xbf16> to vector<1x8x32xbf16>
    tpu.vector_store %arg7[%c0_6, %c0_7, %c0_8], %10 {strides = array<i32>} : memref<1x8x32xbf16, #tpu.memory_space<vmem>>, vector<1x8x32xbf16>,
    %c0_9 = arith.constant 0 : index
    %c0_10 = arith.constant 0 : index
    %c0_11 = arith.constant 0 : index
    %11 = vector.load %arg2[%c0_9, %c0_10, %c0_11] : memref<1x8x32xbf16, #tpu.memory_space<vmem>>, vector<1x8x32xbf16>
    %12 = vector.shape_cast %11 : vector<1x8x32xbf16> to vector<8x32xbf16>
    %c0_12 = arith.constant 0 : index
    %c0_13 = arith.constant 0 : index
    %13 = vector.load %arg5[%c0_12, %c0_13] : memref<32x32xbf16, #tpu.memory_space<vmem>>, vector<32x32xbf16>
    %cst_14 = arith.constant dense<0.000000e+00> : vector<8x32xf32>
    %14 = tpu.matmul %12, %13, %cst_14 {dimension_numbers = #tpu.dot_dimension_numbers<[1], [0], [0], [1], [0, 0, 1, 1], [], []>} : vector<8x32xbf16>, vector<32x32xbf16>, vector<8x32xf32> -> vector<8x32xf32>
    %c0_15 = arith.constant 0 : index
    %c0_16 = arith.constant 0 : index
    %15 = vector.load %arg6[%c0_15, %c0_16] : memref<1x32xf32, #tpu.memory_space<vmem>>, vector<1x32xf32>
    %16 = vector.broadcast %15 : vector<1x32xf32> to vector<8x32xf32>
    %17 = arith.addf %14, %16 : vector<8x32xf32>
    %18 = arith.truncf %17 : vector<8x32xf32> to vector<8x32xbf16>
    %c0_17 = arith.constant 0 : index
    %c0_18 = arith.constant 0 : index
    %c0_19 = arith.constant 0 : index
    %19 = vector.load %arg8[%c0_17, %c0_18, %c0_19] : memref<1x8x32xbf16, #tpu.memory_space<vmem>>, vector<1x8x32xbf16>
    %20 = vector.shape_cast %19 : vector<1x8x32xbf16> to vector<8x32xbf16>
    %21 = vector.shape_cast %18 : vector<8x32xbf16> to vector<1x8x32xbf16>
    tpu.vector_store %arg8[%c0_17, %c0_18, %c0_19], %21 {strides = array<i32>} : memref<1x8x32xbf16, #tpu.memory_space<vmem>>, vector<1x8x32xbf16>,
    return
  }
  func.func @transform_0(%arg0: i32) -> (i32, i32, i32) {
    %c0_i32 = arith.constant 0 : i32
    %c0_i32_0 = arith.constant 0 : i32
    %c0_i32_1 = arith.constant 0 : i32
    return %arg0, %c0_i32, %c0_i32_0 : i32, i32, i32
  }
  func.func @transform_1(%arg0: i32) -> (i32, i32, i32) {
    %c0_i32 = arith.constant 0 : i32
    %c0_i32_0 = arith.constant 0 : i32
    %c0_i32_1 = arith.constant 0 : i32
    return %arg0, %c0_i32, %c0_i32_0 : i32, i32, i32
  }
  func.func @transform_2(%arg0: i32) -> (i32, i32) {
    %c0_i32 = arith.constant 0 : i32
    %c0_i32_0 = arith.constant 0 : i32
    %c0_i32_1 = arith.constant 0 : i32
    return %c0_i32, %c0_i32_0 : i32, i32
  }
  func.func @transform_3(%arg0: i32) -> (i32, i32) {
    %c0_i32 = arith.constant 0 : i32
    %c0_i32_0 = arith.constant 0 : i32
    %c0_i32_1 = arith.constant 0 : i32
    return %c0_i32, %c0_i32_0 : i32, i32
  }
  func.func @transform_4(%arg0: i32) -> (i32, i32) {
    %c0_i32 = arith.constant 0 : i32
    %c0_i32_0 = arith.constant 0 : i32
    %c0_i32_1 = arith.constant 0 : i32
    return %c0_i32, %c0_i32_0 : i32, i32
  }
  func.func @transform_5(%arg0: i32) -> (i32, i32) {
    %c0_i32 = arith.constant 0 : i32
    %c0_i32_0 = arith.constant 0 : i32
    %c0_i32_1 = arith.constant 0 : i32
    return %c0_i32, %c0_i32_0 : i32, i32
  }
  func.func @transform_6(%arg0: i32) -> (i32, i32, i32) {
    %c0_i32 = arith.constant 0 : i32
    %c0_i32_0 = arith.constant 0 : i32
    %c0_i32_1 = arith.constant 0 : i32
    return %arg0, %c0_i32, %c0_i32_0 : i32, i32, i32
  }
  func.func @transform_7(%arg0: i32) -> (i32, i32, i32) {
    %c0_i32 = arith.constant 0 : i32
    %c0_i32_0 = arith.constant 0 : i32
    %c0_i32_1 = arith.constant 0 : i32
    return %arg0, %c0_i32, %c0_i32_0 : i32, i32, i32
  }
}

</mosaic_0001>

<llo_original>
// kernel: tpu_custom_call.1
$region0: #{tpu_custom_call.1}
  #allocation0 [shape = 'u32[]', space=smem, size = 0x4, offset = 0x4, fixed_abs, tag = 'smem constant byte address 0x4 - core index']
  #allocation1 [shape = 'u32[72,128]{1,0:T(1,128)}', space=vmem, size = 0x9000, scoped, tag = 'internal scratch']
  %s0 = inlined_call_operand.hbm [shape: bf16[2,8,32], index: 0, kind: input, shape index: {}]
  %s1 = inlined_call_operand.hbm [shape: bf16[2,8,32], index: 1, kind: input, shape index: {}]
  %s2 = inlined_call_operand.hbm [shape: bf16[32,32], index: 2, kind: input, shape index: {}]
  %s3 = inlined_call_operand.vmem [shape: f32[1,32], index: 3, kind: input, shape index: {}]
  %s4 = inlined_call_operand.hbm [shape: bf16[32,32], index: 4, kind: input, shape index: {}]
  %s5 = inlined_call_operand.vmem [shape: f32[1,32], index: 5, kind: input, shape index: {}]
  %s6 = inlined_call_operand.hbm [shape: bf16[2,8,32], index: 6, kind: output, shape index: {0}]
  %s7 = inlined_call_operand.hbm [shape: bf16[2,8,32], index: 7, kind: output, shape index: {1}]
  %8 = xla_tuple %s6, %s7
  %s9 = sld [smem:[#allocation0]]
  $region81: #{tpu_custom_call.1} parent=0
    _
  %s11 = ssub.s32 1, %s9
  %s12 = scalar_select 0, %s11, %s9
  $region1: #{tpu_custom_call.1} parent=0
    #allocation2 [shape = 'u8[4096]{0}', space=vmem, size = 0x1000, scoped, tag = 'input window, operand 0']
    #allocation3 [shape = 's32[2]{0}', space=sflag, size = 0x8, scoped, tag = 'scoped memory for tpu_custom_call.1']
    #allocation4 [shape = 's32[2]{0}', space=sflag, size = 0x8, scoped, tag = 'scoped memory for tpu_custom_call.1']
    #allocation5 [shape = 'u8[4096]{0}', space=vmem, size = 0x1000, scoped, tag = 'input window, operand 1']
    #allocation6 [shape = 's32[2]{0}', space=sflag, size = 0x8, scoped, tag = 'scoped memory for tpu_custom_call.1']
    #allocation7 [shape = 'u8[8192]{0}', space=vmem, size = 0x2000, scoped, tag = 'input window, operand 2, single buffered']
    #allocation8 [shape = 'u8[8192]{0}', space=vmem, size = 0x2000, scoped, tag = 'input window, operand 4, single buffered']
    #allocation9 [shape = 's32[1]{0}', space=sflag, size = 0x4, scoped, tag = 'scoped memory for tpu_custom_call.1']
    #allocation10 [shape = 'u8[4096]{0}', space=vmem, size = 0x1000, scoped, tag = 'output window, operand 0']
    #allocation11 [shape = 'u8[4096]{0}', space=vmem, size = 0x1000, scoped, tag = 'output window, operand 1']
    #allocation12 [shape = 's32[2]{0}', space=sflag, size = 0x8, scoped, tag = 'scoped memory for tpu_custom_call.1']
    %13 = vsyncpa [#allocation3], 0
    %s14 = scalar_lea.sflag [#allocation3], 1
    %15 = vsyncpa %s14, 0
    %16 = vsyncpa [#allocation6], 0
    %s17 = scalar_lea.sflag [#allocation6], 1
    %18 = vsyncpa %s17, 0
    %19 = vsyncpa [#allocation9], 0
    %20 = vsyncpa [#allocation4], 0
    %s21 = scalar_lea.sflag [#allocation4], 1
    %22 = vsyncpa %s21, 0
    %23 = vsyncpa [#allocation12], 0
    %s24 = scalar_lea.sflag [#allocation12], 1
    %25 = vsyncpa %s24, 0
    loop: start=0, step=1, limit=4
    $region2: #{tpu_custom_call.1} parent=1 // loop_pre_header
      _
    $region3: #{tpu_custom_call.1} parent=1 // loop_header
      %s27 = sphi 0, %s31
      %p28 = scmp.ge.s32.totalorder %s27, 4
      %s37 = sphi 0, %s39
      %s40 = sphi 0, %s37
      %s41 = sphi 0, %s40
      %s57 = sphi 0, %s41
      %s63 = sphi 0, %s65
      %s66 = sphi 0, %s63
      %s67 = sphi 0, %s66
      %s83 = sphi 0, %s67
      %s87 = sphi 0, %s87
      %s89 = sphi 0, %s87
      %s90 = sphi 0, %s89
      %s104 = sphi 0, %s90
      %s108 = sphi 0, %s108
      %s110 = sphi 0, %s108
      %s111 = sphi 0, %s110
      %s125 = sphi 0, %s111
      %s129 = sphi 0, %s129
      %s131 = sphi 0, %s129
      %s132 = sphi 0, %s131
      %s146 = sphi 0, %s132
      %s150 = sphi 0, %s150
      %s152 = sphi 0, %s150
      %s153 = sphi 0, %s152
      %s167 = sphi 0, %s153
      %s173 = sphi 0, %s175
      %s176 = sphi 0, %s173
      %s177 = sphi 0, %s176
      %s193 = sphi 0, %s177
      %s199 = sphi 0, %s201
      %s202 = sphi 0, %s199
      %s203 = sphi 0, %s202
      %s219 = sphi 0, %s203
    $region4: #{tpu_custom_call.1} parent=1 // loop_header_branch
      %30 = sbr.rel (%p28) target = $region8
    $region5: #{tpu_custom_call.1} parent=1 // loop_body
      %s32 = ssub.s32 %s27, 1
      %s33 = ssub.s32 %s27, 2
      %s34 = sadd.s32 %s27, 1
      %s35 = ssub.s32 %s27, %s34
      %p36 = scmp.eq.s32.totalorder %s35, 0
      %s38 = sadd.s32 %s37, 1
      %s39 = scalar_select %p36, %s37, %s38
      %p42 = pneg %p36
      %p43 = scmp.eq.s32.totalorder %s27, 1
      %p44 = por %p42, %p43
      %p45 = scmp.ne.s32.totalorder %s37, %s40
      %p46 = scmp.eq.s32.totalorder %s27, 0
      %p47 = por %p45, %p46
      %p48 = scmp.ne.s32.totalorder %s37, %s40
      %p49 = scmp.eq.s32.totalorder %s32, 1
      %p50 = por %p48, %p49
      %p51 = scmp.ne.s32.totalorder %s40, %s41
      %p52 = scmp.eq.s32.totalorder %s32, 0
      %p53 = por %p51, %p52
      %p54 = scmp.ne.s32.totalorder %s40, %s41
      %p55 = scmp.eq.s32.totalorder %s33, 1
      %p56 = por %p54, %p55
      %p58 = scmp.ne.s32.totalorder %s41, %s57
      %p59 = scmp.eq.s32.totalorder %s33, 0
      %p60 = por %p58, %p59
      %s61 = ssub.s32 %s27, %s34
      %p62 = scmp.eq.s32.totalorder %s61, 0
      %s64 = sadd.s32 %s63, 1
      %s65 = scalar_select %p62, %s63, %s64
      %p68 = pneg %p62
      %p69 = scmp.eq.s32.totalorder %s27, 1
      %p70 = por %p68, %p69
      %p71 = scmp.ne.s32.totalorder %s63, %s66
      %p72 = scmp.eq.s32.totalorder %s27, 0
      %p73 = por %p71, %p72
      %p74 = scmp.ne.s32.totalorder %s63, %s66
      %p75 = scmp.eq.s32.totalorder %s32, 1
      %p76 = por %p74, %p75
      %p77 = scmp.ne.s32.totalorder %s66, %s67
      %p78 = scmp.eq.s32.totalorder %s32, 0
      %p79 = por %p77, %p78
      %p80 = scmp.ne.s32.totalorder %s66, %s67
      %p81 = scmp.eq.s32.totalorder %s33, 1
      %p82 = por %p80, %p81
      %p84 = scmp.ne.s32.totalorder %s67, %s83
      %p85 = scmp.eq.s32.totalorder %s33, 0
      %p86 = por %p84, %p85
      %s88 = sadd.s32 %s87, 1
      %p91 = scmp.eq.s32.totalorder %s27, 1
      %p92 = scmp.ne.s32.totalorder %s87, %s89
      %p93 = scmp.eq.s32.totalorder %s27, 0
      %p94 = por %p92, %p93
      %p95 = scmp.ne.s32.totalorder %s87, %s89
      %p96 = scmp.eq.s32.totalorder %s32, 1
      %p97 = por %p95, %p96
      %p98 = scmp.ne.s32.totalorder %s89, %s90
      %p99 = scmp.eq.s32.totalorder %s32, 0
      %p100 = por %p98, %p99
      %p101 = scmp.ne.s32.totalorder %s89, %s90
      %p102 = scmp.eq.s32.totalorder %s33, 1
      %p103 = por %p101, %p102
      %p105 = scmp.ne.s32.totalorder %s90, %s104
      %p106 = scmp.eq.s32.totalorder %s33, 0
      %p107 = por %p105, %p106
      %s109 = sadd.s32 %s108, 1
      %p112 = scmp.eq.s32.totalorder %s27, 1
      %p113 = scmp.ne.s32.totalorder %s108, %s110
      %p114 = scmp.eq.s32.totalorder %s27, 0
      %p115 = por %p113, %p114
      %p116 = scmp.ne.s32.totalorder %s108, %s110
      %p117 = scmp.eq.s32.totalorder %s32, 1
      %p118 = por %p116, %p117
      %p119 = scmp.ne.s32.totalorder %s110, %s111
      %p120 = scmp.eq.s32.totalorder %s32, 0
      %p121 = por %p119, %p120
      %p122 = scmp.ne.s32.totalorder %s110, %s111
      %p123 = scmp.eq.s32.totalorder %s33, 1
      %p124 = por %p122, %p123
      %p126 = scmp.ne.s32.totalorder %s111, %s125
      %p127 = scmp.eq.s32.totalorder %s33, 0
      %p128 = por %p126, %p127
      %s130 = sadd.s32 %s129, 1
      %p133 = scmp.eq.s32.totalorder %s27, 1
      %p134 = scmp.ne.s32.totalorder %s129, %s131
      %p135 = scmp.eq.s32.totalorder %s27, 0
      %p136 = por %p134, %p135
      %p137 = scmp.ne.s32.totalorder %s129, %s131
      %p138 = scmp.eq.s32.totalorder %s32, 1
      %p139 = por %p137, %p138
      %p140 = scmp.ne.s32.totalorder %s131, %s132
      %p141 = scmp.eq.s32.totalorder %s32, 0
      %p142 = por %p140, %p141
      %p143 = scmp.ne.s32.totalorder %s131, %s132
      %p144 = scmp.eq.s32.totalorder %s33, 1
      %p145 = por %p143, %p144
      %p147 = scmp.ne.s32.totalorder %s132, %s146
      %p148 = scmp.eq.s32.totalorder %s33, 0
      %p149 = por %p147, %p148
      %s151 = sadd.s32 %s150, 1
      %p154 = scmp.eq.s32.totalorder %s27, 1
      %p155 = scmp.ne.s32.totalorder %s150, %s152
      %p156 = scmp.eq.s32.totalorder %s27, 0
      %p157 = por %p155, %p156
      %p158 = scmp.ne.s32.totalorder %s150, %s152
      %p159 = scmp.eq.s32.totalorder %s32, 1
      %p160 = por %p158, %p159
      %p161 = scmp.ne.s32.totalorder %s152, %s153
      %p162 = scmp.eq.s32.totalorder %s32, 0
      %p163 = por %p161, %p162
      %p164 = scmp.ne.s32.totalorder %s152, %s153
      %p165 = scmp.eq.s32.totalorder %s33, 1
      %p166 = por %p164, %p165
      %p168 = scmp.ne.s32.totalorder %s153, %s167
      %p169 = scmp.eq.s32.totalorder %s33, 0
      %p170 = por %p168, %p169
      %s171 = ssub.s32 %s27, %s34
      %p172 = scmp.eq.s32.totalorder %s171, 0
      %s174 = sadd.s32 %s173, 1
      %s175 = scalar_select %p172, %s173, %s174
      %p178 = pneg %p172
      %p179 = scmp.eq.s32.totalorder %s27, 1
      %p180 = por %p178, %p179
      %p181 = scmp.ne.s32.totalorder %s173, %s176
      %p182 = scmp.eq.s32.totalorder %s27, 0
      %p183 = por %p181, %p182
      %p184 = scmp.ne.s32.totalorder %s173, %s176
      %p185 = scmp.eq.s32.totalorder %s32, 1
      %p186 = por %p184, %p185
      %p187 = scmp.ne.s32.totalorder %s176, %s177
      %p188 = scmp.eq.s32.totalorder %s32, 0
      %p189 = por %p187, %p188
      %p190 = scmp.ne.s32.totalorder %s176, %s177
      %p191 = scmp.eq.s32.totalorder %s33, 1
      %p192 = por %p190, %p191
      %p194 = scmp.ne.s32.totalorder %s177, %s193
      %p195 = scmp.eq.s32.totalorder %s33, 0
      %p196 = por %p194, %p195
      %s197 = ssub.s32 %s27, %s34
      %p198 = scmp.eq.s32.totalorder %s197, 0
      %s200 = sadd.s32 %s199, 1
      %s201 = scalar_select %p198, %s199, %s200
      %p204 = pneg %p198
      %p205 = scmp.eq.s32.totalorder %s27, 1
      %p206 = por %p204, %p205
      %p207 = scmp.ne.s32.totalorder %s199, %s202
      %p208 = scmp.eq.s32.totalorder %s27, 0
      %p209 = por %p207, %p208
      %p210 = scmp.ne.s32.totalorder %s199, %s202
      %p211 = scmp.eq.s32.totalorder %s32, 1
      %p212 = por %p210, %p211
      %p213 = scmp.ne.s32.totalorder %s202, %s203
      %p214 = scmp.eq.s32.totalorder %s32, 0
      %p215 = por %p213, %p214
      %p216 = scmp.ne.s32.totalorder %s202, %s203
      %p217 = scmp.eq.s32.totalorder %s33, 1
      %p218 = por %p216, %p217
      %p220 = scmp.ne.s32.totalorder %s203, %s219
      %p221 = scmp.eq.s32.totalorder %s33, 0
      %p222 = por %p220, %p221
      %p223 = scmp.le.s32.totalorder 1, %s27
      %p224 = scmp.lt.s32.totalorder %s27, 3
      %p225 = pnand %p223, %p224
      %p226 = pneg %p225
      // Predicated region
      $region9: #{tpu_custom_call.1} parent=5 // pred_check
        _
      $region10: #{tpu_custom_call.1} parent=5 // pred_check_branch
        %228 = sbr.rel (%p225) target = $region12
      $region11: #{tpu_custom_call.1} parent=5 // pred_region
        %s229 = ssub.s32 %s27, 1
        // Predicated region
        $region13: #{tpu_custom_call.1} parent=11 // pred_check
          %p230 = pneg %p100
        $region14: #{tpu_custom_call.1} parent=11 // pred_check_branch
          %232 = sbr.rel (%p230) target = $region16
        $region15: #{tpu_custom_call.1} parent=11 // pred_region
          %234 = vsyncadd [#allocation6], 0
          %s235 = sshll.u32 %s2, 4
          %s236 = int_to_ptr.hbm [resolvable:$true] %s235
          %s237 = sshll.u32 [#allocation7], 4
          %s238 = int_to_ptr.vmem [resolvable:$true] %s237
          %243 = dma.hbm_to_vmem [thread:$0]  %s236, 256, %s238, [#allocation6], 64, 64, 4
        $region16: #{tpu_custom_call.1} parent=11 // pred_fallthru
          _
        // Predicated region
        $region17: #{tpu_custom_call.1} parent=11 // pred_check
          %p244 = pneg %p121
        $region18: #{tpu_custom_call.1} parent=11 // pred_check_branch
          %246 = sbr.rel (%p244) target = $region20
        $region19: #{tpu_custom_call.1} parent=11 // pred_region
          _
        $region20: #{tpu_custom_call.1} parent=11 // pred_fallthru
          _
        // Predicated region
        $region21: #{tpu_custom_call.1} parent=11 // pred_check
          %p247 = pneg %p142
        $region22: #{tpu_custom_call.1} parent=11 // pred_check_branch
          %249 = sbr.rel (%p247) target = $region24
        $region23: #{tpu_custom_call.1} parent=11 // pred_region
          %251 = vsyncadd [#allocation9], 0
          %s252 = sshll.u32 %s4, 4
          %s253 = int_to_ptr.hbm [resolvable:$true] %s252
          %s254 = sshll.u32 [#allocation8], 4
          %s255 = int_to_ptr.vmem [resolvable:$true] %s254
          %260 = dma.hbm_to_vmem [thread:$0]  %s253, 256, %s255, [#allocation9], 64, 64, 4
        $region24: #{tpu_custom_call.1} parent=11 // pred_fallthru
          _
        // Predicated region
        $region25: #{tpu_custom_call.1} parent=11 // pred_check
          %p261 = pneg %p163
        $region26: #{tpu_custom_call.1} parent=11 // pred_check_branch
          %263 = sbr.rel (%p261) target = $region28
        $region27: #{tpu_custom_call.1} parent=11 // pred_region
          _
        $region28: #{tpu_custom_call.1} parent=11 // pred_fallthru
          _
      $region12: #{tpu_custom_call.1} parent=5 // pred_fallthru
        _
      %p264 = scmp.lt.s32.totalorder %s27, 2
      // Predicated region
      $region29: #{tpu_custom_call.1} parent=5 // pred_check
        %p265 = pneg %p264
      $region30: #{tpu_custom_call.1} parent=5 // pred_check_branch
        %267 = sbr.rel (%p265) target = $region32
      $region31: #{tpu_custom_call.1} parent=5 // pred_region
        // Predicated region
        $region33: #{tpu_custom_call.1} parent=31 // pred_check
          %p268 = pneg %p47
        $region34: #{tpu_custom_call.1} parent=31 // pred_check_branch
          %270 = sbr.rel (%p268) target = $region36
        $region35: #{tpu_custom_call.1} parent=31 // pred_region
          %s271 = sand.u32 %s37, 1
          %s272 = scalar_lea.sflag [#allocation3], %s271
          %s273 = sand.u32 %s37, 1
          %s274 = smul.addr %s273, 4
          %s275 = scalar_lea.vmem [#allocation2], %s274
          %277 = vsyncadd %s272, 0
          %s278 = smul.addr %s27, 4
          %s279 = scalar_lea.hbm %s0, %s278
          %s281 = sshll.u32 %s279, 4
          %s282 = int_to_ptr.hbm [resolvable:$true] %s281
          %s283 = sshll.u32 %s275, 4
          %s284 = int_to_ptr.vmem [resolvable:$true] %s283
          %286 = dma.hbm_to_vmem [thread:$0]  %s282, 64, %s284, %s272
        $region36: #{tpu_custom_call.1} parent=31 // pred_fallthru
          _
        // Predicated region
        $region37: #{tpu_custom_call.1} parent=31 // pred_check
          %p287 = pneg %p73
        $region38: #{tpu_custom_call.1} parent=31 // pred_check_branch
          %289 = sbr.rel (%p287) target = $region40
        $region39: #{tpu_custom_call.1} parent=31 // pred_region
          %s290 = sand.u32 %s27, 1
          %s291 = scalar_lea.sflag [#allocation6], %s290
          %s292 = sand.u32 %s63, 1
          %s293 = smul.addr %s292, 4
          %s294 = scalar_lea.vmem [#allocation5], %s293
          %296 = vsyncadd %s291, 0
          %s297 = smul.addr %s27, 4
          %s298 = scalar_lea.hbm %s1, %s297
          %s300 = sshll.u32 %s298, 4
          %s301 = int_to_ptr.hbm [resolvable:$true] %s300
          %s302 = sshll.u32 %s294, 4
          %s303 = int_to_ptr.vmem [resolvable:$true] %s302
          %305 = dma.hbm_to_vmem [thread:$0]  %s301, 64, %s303, %s291
        $region40: #{tpu_custom_call.1} parent=31 // pred_fallthru
          _
      $region32: #{tpu_custom_call.1} parent=5 // pred_fallthru
        _
      %p306 = scmp.le.s32.totalorder 1, %s27
      %p307 = scmp.lt.s32.totalorder %s27, 3
      %p308 = pnand %p306, %p307
      %p309 = pneg %p308
      // Predicated region
      $region41: #{tpu_custom_call.1} parent=5 // pred_check
        _
      $region42: #{tpu_custom_call.1} parent=5 // pred_check_branch
        %311 = sbr.rel (%p308) target = $region44
      $region43: #{tpu_custom_call.1} parent=5 // pred_region
        %s312 = ssub.s32 %s27, 1
        %s313 = sand.u32 %s40, 1
        %s314 = scalar_lea.sflag [#allocation3], %s313
        %s315 = sand.u32 %s40, 1
        %s316 = smul.addr %s315, 4
        %s317 = scalar_lea.vmem [#allocation2], %s316
        // Predicated region
        $region45: #{tpu_custom_call.1} parent=43 // pred_check
          %p318 = pneg %p53
        $region46: #{tpu_custom_call.1} parent=43 // pred_check_branch
          %320 = sbr.rel (%p318) target = $region48
        $region47: #{tpu_custom_call.1} parent=43 // pred_region
          %322 = dma.done %s314, 64
        $region48: #{tpu_custom_call.1} parent=43 // pred_fallthru
          _
        %s323 = sand.u32 %s32, 1
        %s324 = scalar_lea.sflag [#allocation6], %s323
        %s325 = sand.u32 %s66, 1
        %s326 = smul.addr %s325, 4
        %s327 = scalar_lea.vmem [#allocation5], %s326
        // Predicated region
        $region49: #{tpu_custom_call.1} parent=43 // pred_check
          %p328 = pneg %p79
        $region50: #{tpu_custom_call.1} parent=43 // pred_check_branch
          %330 = sbr.rel (%p328) target = $region52
        $region51: #{tpu_custom_call.1} parent=43 // pred_region
          %332 = dma.done %s324, 64
        $region52: #{tpu_custom_call.1} parent=43 // pred_fallthru
          _
        // Predicated region
        $region53: #{tpu_custom_call.1} parent=43 // pred_check
          %p333 = pneg %p100
        $region54: #{tpu_custom_call.1} parent=43 // pred_check_branch
          %335 = sbr.rel (%p333) target = $region56
        $region55: #{tpu_custom_call.1} parent=43 // pred_region
          %337 = dma.done [#allocation6], 256
        $region56: #{tpu_custom_call.1} parent=43 // pred_fallthru
          _
        // Predicated region
        $region57: #{tpu_custom_call.1} parent=43 // pred_check
          %p338 = pneg %p142
        $region58: #{tpu_custom_call.1} parent=43 // pred_check_branch
          %340 = sbr.rel (%p338) target = $region60
        $region59: #{tpu_custom_call.1} parent=43 // pred_region
          %342 = dma.done [#allocation9], 256
        $region60: #{tpu_custom_call.1} parent=43 // pred_fallthru
          _
        %s343 = sand.u32 %s40, 1
        %s344 = scalar_lea.sflag [#allocation3], %s343
        %s345 = sand.u32 %s40, 1
        %s346 = smul.addr %s345, 4
        %s347 = scalar_lea.vmem [#allocation2], %s346
        %p348 = pneg %p53
        %p349 = pneg %p50
        %s350 = sand.u32 %s32, 1
        %s351 = scalar_lea.sflag [#allocation6], %s350
        %s352 = sand.u32 %s66, 1
        %s353 = smul.addr %s352, 4
        %s354 = scalar_lea.vmem [#allocation5], %s353
        %p355 = pneg %p79
        %p356 = pneg %p76
        %p357 = pneg %p100
        %p358 = pneg %p97
        %p359 = pneg %p121
        %p360 = pneg %p118
        %p361 = pneg %p142
        %p362 = pneg %p139
        %p363 = pneg %p163
        %p364 = pneg %p160
        %p365 = pneg %p189
        %p366 = pneg %p186
        %s367 = sand.u32 %s176, 1
        %s368 = scalar_lea.sflag [#allocation4], %s367
        %s369 = sand.u32 %s176, 1
        %s370 = smul.addr %s369, 4
        %s371 = scalar_lea.vmem [#allocation10], %s370
        %p372 = pneg %p215
        %p373 = pneg %p212
        %s374 = sand.u32 %s202, 1
        %s375 = scalar_lea.sflag [#allocation12], %s374
        %s376 = sand.u32 %s202, 1
        %s377 = smul.addr %s376, 4
        %s378 = scalar_lea.vmem [#allocation11], %s377
        %v380 = vld [vmem:[%s317] sm:$0xf]
        %v381 = vld [vmem:[#allocation7] sm:$0xf]
        %v382 = vld [vmem:[#allocation7 + $0x4] sm:$0xf]
        %v383 = vld [vmem:[#allocation7 + $0x8] sm:$0xf]
        %v384 = vld [vmem:[#allocation7 + $0xc] sm:$0xf]
        %v385 = vld [vmem:[%s3] sm:$0x1]
        %v387 = vperm.slane %v385, 0
        %v393 = vunpack.c.l.b16 %v381
        %v394 = vunpack.c.l.b16 %v382
        %v395 = vunpack.c.l.b16 %v383
        %v396 = vunpack.c.l.b16 %v384
        %v397 = vpack.c.b16 %v394, %v393
        %v398 = vpack.c.b16 %v396, %v395
        %vm401 = vcmask 261120
        %v403 = vsel %vm401, %v380, 0
        %405 = vmatpush.bf16.msra.mxu0 0
        %406 = vmatpush.bf16.msra.mxu0 0
        %407 = vmatpush.bf16.msra.mxu0 0
        %408 = vmatpush.bf16.msra.mxu0 0
        %409 = vmatpush.bf16.msra.mxu0 0
        %410 = vmatpush.bf16.msra.mxu0 0
        %411 = vmatpush.bf16.msra.mxu0 %v398
        %412 = vmatpush.bf16.msra.mxu0 %v397
        %413 = vmatmul.bf16.gmra.mxu0 %v403
        %v414 = vpop.f32.mrf.mxu0
        %v415 = vadd.f32 %v387, %v414
        %v416 = vpop.f32.mrf.mxu0
        %417 = vdwg.mxu0
        %v418 = vpack.c.bf16 %v415, %v415
        %vm419 = vcmask 257024
        %420 = vst.msk [vmem:[%s371] sm:$0xf] %vm419, %v418
        %v421 = vld [vmem:[%s327] sm:$0xf]
        %v422 = vld [vmem:[#allocation8] sm:$0xf]
        %v423 = vld [vmem:[#allocation8 + $0x4] sm:$0xf]
        %v424 = vld [vmem:[#allocation8 + $0x8] sm:$0xf]
        %v425 = vld [vmem:[#allocation8 + $0xc] sm:$0xf]
        %v426 = vld [vmem:[%s5] sm:$0x1]
        %v428 = vperm.slane %v426, 0
        %v434 = vunpack.c.l.b16 %v422
        %v435 = vunpack.c.l.b16 %v423
        %v436 = vunpack.c.l.b16 %v424
        %v437 = vunpack.c.l.b16 %v425
        %v438 = vpack.c.b16 %v435, %v434
        %v439 = vpack.c.b16 %v437, %v436
        %v443 = vsel %vm401, %v421, 0
        %445 = vmatpush.bf16.msra.mxu0 0
        %446 = vmatpush.bf16.msra.mxu0 0
        %447 = vmatpush.bf16.msra.mxu0 0
        %448 = vmatpush.bf16.msra.mxu0 0
        %449 = vmatpush.bf16.msra.mxu0 0
        %450 = vmatpush.bf16.msra.mxu0 0
        %451 = vmatpush.bf16.msra.mxu0 %v439
        %452 = vmatpush.bf16.msra.mxu0 %v438
        %453 = vmatmul.bf16.gmra.mxu0 %v443
        %v454 = vpop.f32.mrf.mxu0
        %v455 = vadd.f32 %v428, %v454
        %v456 = vpop.f32.mrf.mxu0
        %457 = vdwg.mxu0
        %v458 = vpack.c.bf16 %v455, %v455
        %459 = vst.msk [vmem:[%s378] sm:$0xf] %vm419, %v458
        %s460 = sand.u32 %s176, 1
        %s461 = scalar_lea.sflag [#allocation4], %s460
        %s462 = sand.u32 %s176, 1
        %s463 = smul.addr %s462, 4
        %s464 = scalar_lea.vmem [#allocation10], %s463
        %s465 = sand.u32 %s202, 1
        %s466 = scalar_lea.sflag [#allocation12], %s465
        %s467 = sand.u32 %s202, 1
        %s468 = smul.addr %s467, 4
        %s469 = scalar_lea.vmem [#allocation11], %s468
        // Predicated region
        $region61: #{tpu_custom_call.1} parent=43 // pred_check
          %p470 = pneg %p186
        $region62: #{tpu_custom_call.1} parent=43 // pred_check_branch
          %472 = sbr.rel (%p470) target = $region64
        $region63: #{tpu_custom_call.1} parent=43 // pred_region
          %474 = vsyncadd %s461, 0
          %s475 = smul.addr %s32, 4
          %s476 = scalar_lea.hbm %s6, %s475
          %s478 = sshll.u32 %s464, 4
          %s479 = int_to_ptr.vmem [resolvable:$true] %s478
          %s480 = sshll.u32 %s476, 4
          %s481 = int_to_ptr.hbm [resolvable:$true] %s480
          %483 = dma.vmem_to_hbm [thread:$0]  %s479, 64, %s481, %s461
        $region64: #{tpu_custom_call.1} parent=43 // pred_fallthru
          _
        // Predicated region
        $region65: #{tpu_custom_call.1} parent=43 // pred_check
          %p484 = pneg %p212
        $region66: #{tpu_custom_call.1} parent=43 // pred_check_branch
          %486 = sbr.rel (%p484) target = $region68
        $region67: #{tpu_custom_call.1} parent=43 // pred_region
          %488 = vsyncadd %s466, 0
          %s489 = smul.addr %s32, 4
          %s490 = scalar_lea.hbm %s7, %s489
          %s492 = sshll.u32 %s469, 4
          %s493 = int_to_ptr.vmem [resolvable:$true] %s492
          %s494 = sshll.u32 %s490, 4
          %s495 = int_to_ptr.hbm [resolvable:$true] %s494
          %497 = dma.vmem_to_hbm [thread:$0]  %s493, 64, %s495, %s466
        $region68: #{tpu_custom_call.1} parent=43 // pred_fallthru
          _
      $region44: #{tpu_custom_call.1} parent=5 // pred_fallthru
        _
      %p498 = scmp.le.s32.totalorder 2, %s27
      // Predicated region
      $region69: #{tpu_custom_call.1} parent=5 // pred_check
        %p499 = pneg %p498
      $region70: #{tpu_custom_call.1} parent=5 // pred_check_branch
        %501 = sbr.rel (%p499) target = $region72
      $region71: #{tpu_custom_call.1} parent=5 // pred_region
        %s502 = ssub.s32 %s27, 2
        // Predicated region
        $region73: #{tpu_custom_call.1} parent=71 // pred_check
          %p503 = pneg %p192
        $region74: #{tpu_custom_call.1} parent=71 // pred_check_branch
          %505 = sbr.rel (%p503) target = $region76
        $region75: #{tpu_custom_call.1} parent=71 // pred_region
          %s506 = sand.u32 %s177, 1
          %s507 = scalar_lea.sflag [#allocation4], %s506
          %s508 = sand.u32 %s177, 1
          %s509 = smul.addr %s508, 4
          %s510 = scalar_lea.vmem [#allocation10], %s509
          %512 = dma.done %s507, 64
        $region76: #{tpu_custom_call.1} parent=71 // pred_fallthru
          _
        // Predicated region
        $region77: #{tpu_custom_call.1} parent=71 // pred_check
          %p513 = pneg %p218
        $region78: #{tpu_custom_call.1} parent=71 // pred_check_branch
          %515 = sbr.rel (%p513) target = $region80
        $region79: #{tpu_custom_call.1} parent=71 // pred_region
          %s516 = sand.u32 %s203, 1
          %s517 = scalar_lea.sflag [#allocation12], %s516
          %s518 = sand.u32 %s203, 1
          %s519 = smul.addr %s518, 4
          %s520 = scalar_lea.vmem [#allocation11], %s519
          %522 = dma.done %s517, 64
        $region80: #{tpu_custom_call.1} parent=71 // pred_fallthru
          _
      $region72: #{tpu_custom_call.1} parent=5 // pred_fallthru
        _
    $region6: #{tpu_custom_call.1} parent=1 // loop_footer
      %s31 = sadd.s32 1, %s27
    $region7: #{tpu_custom_call.1} parent=1 // loop_footer_branch
      %26 = sbr.rel target = $region3
    $region8: #{tpu_custom_call.1} parent=1 // loop_exit
      _
    %523 = vsyncpa [#allocation3], 1
    %s524 = scalar_lea.sflag [#allocation3], 1
    %525 = vsyncpa %s524, 1
    %526 = vsyncpa [#allocation6], 1
    %s527 = scalar_lea.sflag [#allocation6], 1
    %528 = vsyncpa %s527, 1
    %529 = vsyncpa [#allocation9], 1
    %530 = vsyncpa [#allocation4], 1
    %s531 = scalar_lea.sflag [#allocation4], 1
    %532 = vsyncpa %s531, 1
    %533 = vsyncpa [#allocation12], 1
    %s534 = scalar_lea.sflag [#allocation12], 1
    %535 = vsyncpa %s534, 1

</llo_original>
